<compile_context>
chip_gen: v5e
topology: v5e:2x2
jax: 0.10.0
libtpu: 0.0.40
codegen_flags: <defaults>
</compile_context>

<pallas_src>
import math
import functools

import jax
import jax.numpy as jnp
from jax.experimental import pallas as pl
from jax.experimental.pallas import tpu as pltpu


def make_positional_encoding_table(max_len: int, d_model: int,
                                   dtype=jnp.float32) -> jnp.ndarray:
    """Deterministic sinusoidal PE table, shape (max_len, d_model)."""
    position = jnp.arange(max_len, dtype=jnp.float32)[:, None]            # (L, 1)
    div_term = jnp.exp(
        jnp.arange(0, d_model, 2, dtype=jnp.float32)
        * (-math.log(10000.0) / d_model))                                 # (ceil(D/2),)
    angles = position * div_term                                          # (L, ceil(D/2))
    pe = jnp.zeros((max_len, d_model), dtype=jnp.float32)
    pe = pe.at[:, 0::2].set(jnp.sin(angles))
    pe = pe.at[:, 1::2].set(jnp.cos(angles[:, : d_model // 2]))           # odd-D safe
    return pe.astype(dtype)


# ---------------------------------------------------------------------------
# Kernels
# ---------------------------------------------------------------------------

def _pe_add_kernel(x_ref, pe_ref, o_ref):
    # x_ref: (ts, B, D), pe_ref: (ts, D) -> broadcast add over batch.
    o_ref[...] = (x_ref[...] + pe_ref[...][:, None, :]).astype(o_ref.dtype)


def _pe_add_dropout_kernel(x_ref, pe_ref, bits_ref, o_ref, *, threshold, scale):
    # Integer-threshold dropout: keep iff bits >= p * 2^32, then one where+mul.
    y = x_ref[...] + pe_ref[...][:, None, :]
    keep = bits_ref[...] >= jnp.uint32(threshold)
    o_ref[...] = jnp.where(keep, y * scale, 0.0).astype(o_ref.dtype)


# ---------------------------------------------------------------------------
# Wrapper
# ---------------------------------------------------------------------------

def _choose_seq_tile(S, B, D, itemsize):
    """Pick a seq tile: ~1 MiB x-blocks (safe for v7x's smaller VMEM with
    double-buffered x/bits/out), >=~256 KiB per block to amortize per-step
    overhead, aiming for >=4 grid steps so the pipeline overlaps DMA/compute."""
    row_bytes = max(1, B * D * itemsize)
    max_ts = max(1, (1 << 20) // row_bytes)        # ~1 MiB upper bound per x block
    min_ts = max(1, (256 * 1024) // row_bytes)     # amortize ~0.35 us per grid step
    ts = max(min(S, pl.cdiv(S, 4)), min_ts)        # prefer >= 4 pipelined steps
    ts = min(ts, max_ts, S)
    if ts < S:
        ts = max(8, (ts // 8) * 8)                 # keep (ts, D) PE block sublane-aligned
        ts = min(ts, S)
    return int(ts)


def positional_encoding(x, pe_table, *, p=0.1, training=False, key=None):
    """x: (S, B, D); pe_table: (max_len, D) with max_len >= S."""
    S, B, D = x.shape
    pe = pe_table[:S].astype(x.dtype)

    ts = _choose_seq_tile(S, B, D, jnp.dtype(x.dtype).itemsize)
    grid = (pl.cdiv(S, ts),)

    x_spec = pl.BlockSpec((ts, B, D), lambda i: (i, 0, 0))
    pe_spec = pl.BlockSpec((ts, D), lambda i: (i, 0))
    out_spec = pl.BlockSpec((ts, B, D), lambda i: (i, 0, 0))
    out_shape = jax.ShapeDtypeStruct((S, B, D), x.dtype)
    cparams = pltpu.CompilerParams(dimension_semantics=("parallel",))

    if (not training) or float(p) <= 0.0:
        # Inference path: pure broadcast add, no dropout machinery at all.
        return pl.pallas_call(
            _pe_add_kernel,
            out_shape=out_shape,
            grid=grid,
            in_specs=[x_spec, pe_spec],
            out_specs=out_spec,
            compiler_params=cparams,
        )(x, pe)

    # Training path: dropout mask from uniform uint32 bits, applied in-kernel.
    # TODO(synk): bits are generated wrapper-side (extra HBM read) because
    # pltpu.prng_random_bits has no interpret/CPU lowering; on pure-TPU runs
    # the in-kernel hardware PRNG would avoid streaming the mask from HBM.
    if key is None:
        key = jax.random.PRNGKey(0)
    bits = jax.random.bits(key, (S, B, D), dtype=jnp.uint32)

    threshold = min(int(round(float(p) * 4294967296.0)), 4294967295)
    kernel = functools.partial(
        _pe_add_dropout_kernel,
        threshold=threshold,
        scale=1.0 / (1.0 - float(p)),
    )
    bits_spec = pl.BlockSpec((ts, B, D), lambda i: (i, 0, 0))

    return pl.pallas_call(
        kernel,
        out_shape=out_shape,
        grid=grid,
        in_specs=[x_spec, pe_spec, bits_spec],
        out_specs=out_spec,
        compiler_params=cparams,
    )(x, pe, bits)


if __name__ == "__main__":
    # Small shapes consistent with the module: seq=8, batch=2, d_model=32.
    S, B, D = 8, 2, 32
    MAX_LEN = 64  # stands in for the module's max_len=5000 (synthetic scale)

    key = jax.random.PRNGKey(0)
    kx, kdrop = jax.random.split(key)
    x = jax.random.normal(kx, (S, B, D), dtype=jnp.float32)

    pe_table = make_positional_encoding_table(MAX_LEN, D, dtype=jnp.float32)

    # Eval mode (dropout is identity) -> deterministic, checkable output.
    out = positional_encoding(x, pe_table, p=0.1, training=False)
    out = jax.block_until_ready(out)

    ref = x + pe_table[:S][:, None, :]
    assert out.shape == (S, B, D)
    assert jnp.allclose(out, ref, atol=1e-6, rtol=1e-6), "mismatch vs reference"

    # Training mode exercises the in-kernel dropout (mask/scale) path.
    p = 0.1
    out_train = positional_encoding(x, pe_table, p=p, training=True, key=kdrop)
    out_train = jax.block_until_ready(out_train)
    assert out_train.shape == (S, B, D)
    # Every element is either dropped (0) or scaled by 1/(1-p).
    kept = out_train != 0.0
    assert jnp.allclose(jnp.where(kept, out_train, 0.0),
                        jnp.where(kept, ref / (1.0 - p), 0.0),
                        atol=1e-5, rtol=1e-5), "dropout scaling mismatch"

    print("KERNEL_OK")
</pallas_src>

<mosaic_0001>
module attributes {stable_mosaic.version = 11 : i64} {
  func.func @_pe_add_kernel(%arg0: i32, %arg1: memref<8x2x32xf32, #tpu.memory_space<vmem>>, %arg2: memref<8x32xf32, #tpu.memory_space<vmem>>, %arg3: memref<8x2x32xf32, #tpu.memory_space<vmem>>) attributes {dimension_semantics = [#tpu.dimension_semantics<parallel>], iteration_bounds = array<i64: 1>, scalar_prefetch = 0 : i64, scratch_operands = 0 : i64, tpu.core_type = #tpu.core_type<tc>, window_params = [{transform_indices = @transform_0, window_bounds = array<i64: 8, 2, 32>}, {transform_indices = @transform_1, window_bounds = array<i64: 8, 32>}, {transform_indices = @transform_2, window_bounds = array<i64: 8, 2, 32>}]} {
    %c0 = arith.constant 0 : index
    %c0_0 = arith.constant 0 : index
    %c0_1 = arith.constant 0 : index
    %0 = vector.load %arg1[%c0, %c0_0, %c0_1] : memref<8x2x32xf32, #tpu.memory_space<vmem>>, vector<8x2x32xf32>
    %c0_2 = arith.constant 0 : index
    %c0_3 = arith.constant 0 : index
    %1 = vector.load %arg2[%c0_2, %c0_3] : memref<8x32xf32, #tpu.memory_space<vmem>>, vector<8x32xf32>
    %2 = vector.shape_cast %1 : vector<8x32xf32> to vector<8x1x32xf32>
    %3 = vector.broadcast %2 : vector<8x1x32xf32> to vector<8x2x32xf32>
    %4 = arith.addf %0, %3 : vector<8x2x32xf32>
    %c0_4 = arith.constant 0 : index
    %c0_5 = arith.constant 0 : index
    %c0_6 = arith.constant 0 : index
    %5 = vector.load %arg3[%c0_4, %c0_5, %c0_6] : memref<8x2x32xf32, #tpu.memory_space<vmem>>, vector<8x2x32xf32>
    tpu.vector_store %arg3[%c0_4, %c0_5, %c0_6], %4 {strides = array<i32>} : memref<8x2x32xf32, #tpu.memory_space<vmem>>, vector<8x2x32xf32>,
    return
  }
  func.func @transform_0(%arg0: i32) -> (i32, i32, i32) {
    %c0_i32 = arith.constant 0 : i32
    %c0_i32_0 = arith.constant 0 : i32
    %c0_i32_1 = arith.constant 0 : i32
    return %arg0, %c0_i32, %c0_i32_0 : i32, i32, i32
  }
  func.func @transform_1(%arg0: i32) -> (i32, i32) {
    %c0_i32 = arith.constant 0 : i32
    %c0_i32_0 = arith.constant 0 : i32
    return %arg0, %c0_i32 : i32, i32
  }
  func.func @transform_2(%arg0: i32) -> (i32, i32, i32) {
    %c0_i32 = arith.constant 0 : i32
    %c0_i32_0 = arith.constant 0 : i32
    %c0_i32_1 = arith.constant 0 : i32
    return %arg0, %c0_i32, %c0_i32_0 : i32, i32, i32
  }
}

</mosaic_0001>

<llo_original>
// kernel: tpu_custom_call.1
$region0: #{tpu_custom_call.1}
  #allocation0 [shape = 'u32[]', space=smem, size = 0x4, offset = 0x4, fixed_abs, tag = 'smem constant byte address 0x4 - core index']
  #allocation1 [shape = 'u32[72,128]{1,0:T(1,128)}', space=vmem, size = 0x9000, scoped, tag = 'internal scratch']
  %s0 = inlined_call_operand.hbm [shape: f32[8,2,32], index: 0, kind: input, shape index: {}]
  %s1 = inlined_call_operand.hbm [shape: f32[8,32], index: 1, kind: input, shape index: {}]
  %s2 = inlined_call_operand.hbm [shape: f32[8,2,32], index: 2, kind: output, shape index: {}]
  %s3 = sld [smem:[#allocation0]]
  $region26: #{tpu_custom_call.1} parent=0
    _
  %s5 = ssub.s32 1, %s3
  %s6 = scalar_select 0, %s5, %s3
  $region1: #{tpu_custom_call.1} parent=0
    #allocation2 [shape = 'u8[8192]{0}', space=vmem, size = 0x2000, scoped, tag = 'input window, operand 0, single buffered']
    #allocation3 [shape = 's32[1]{0}', space=sflag, size = 0x4, scoped, tag = 'scoped memory for tpu_custom_call.1']
    #allocation4 [shape = 's32[1]{0}', space=sflag, size = 0x4, scoped, tag = 'scoped memory for tpu_custom_call.1']
    #allocation5 [shape = 'u8[4096]{0}', space=vmem, size = 0x1000, scoped, tag = 'input window, operand 1, single buffered']
    #allocation6 [shape = 's32[1]{0}', space=sflag, size = 0x4, scoped, tag = 'scoped memory for tpu_custom_call.1']
    #allocation7 [shape = 'u8[8192]{0}', space=vmem, size = 0x2000, scoped, tag = 'output window, operand 0, single buffered']
    %7 = vsyncpa [#allocation3], 0
    %8 = vsyncpa [#allocation6], 0
    %9 = vsyncpa [#allocation4], 0
    // Predicated region
    $region2: #{tpu_custom_call.1} parent=1 // pred_check
      _
    $region3: #{tpu_custom_call.1} parent=1 // pred_check_branch
      %11 = sbr.rel (0) target = $region5
    $region4: #{tpu_custom_call.1} parent=1 // pred_region
      %13 = vsyncadd [#allocation3], 0
      %s14 = sshll.u32 %s0, 4
      %s15 = int_to_ptr.hbm [resolvable:$true] %s14
      %s16 = sshll.u32 [#allocation2], 4
      %s17 = int_to_ptr.vmem [resolvable:$true] %s16
      %22 = dma.hbm_to_vmem [thread:$0]  %s15, 256, %s17, [#allocation3], 32, 32, 2
    $region5: #{tpu_custom_call.1} parent=1 // pred_fallthru
      _
    // Predicated region
    $region6: #{tpu_custom_call.1} parent=1 // pred_check
      _
    $region7: #{tpu_custom_call.1} parent=1 // pred_check_branch
      %24 = sbr.rel (0) target = $region9
    $region8: #{tpu_custom_call.1} parent=1 // pred_region
      %26 = vsyncadd [#allocation6], 0
      %s28 = sshll.u32 %s1, 4
      %s29 = int_to_ptr.hbm [resolvable:$true] %s28
      %s30 = sshll.u32 [#allocation5], 4
      %s31 = int_to_ptr.vmem [resolvable:$true] %s30
      %33 = dma.hbm_to_vmem [thread:$0]  %s29, 128, %s31, [#allocation6]
    $region9: #{tpu_custom_call.1} parent=1 // pred_fallthru
      _
    // Predicated region
    $region10: #{tpu_custom_call.1} parent=1 // pred_check
      _
    $region11: #{tpu_custom_call.1} parent=1 // pred_check_branch
      %35 = sbr.rel (0) target = $region13
    $region12: #{tpu_custom_call.1} parent=1 // pred_region
      %37 = dma.done [#allocation3], 256
    $region13: #{tpu_custom_call.1} parent=1 // pred_fallthru
      _
    // Predicated region
    $region14: #{tpu_custom_call.1} parent=1 // pred_check
      _
    $region15: #{tpu_custom_call.1} parent=1 // pred_check_branch
      %39 = sbr.rel (0) target = $region17
    $region16: #{tpu_custom_call.1} parent=1 // pred_region
      %41 = dma.done [#allocation6], 128
    $region17: #{tpu_custom_call.1} parent=1 // pred_fallthru
      _
    %v42 = vld [vmem:[#allocation2] sm:$0x3]
    %v43 = vld [vmem:[#allocation2 + $0x2] sm:$0x3]
    %v44 = vld [vmem:[#allocation2 + $0x4] sm:$0x3]
    %v45 = vld [vmem:[#allocation2 + $0x6] sm:$0x3]
    %v46 = vld [vmem:[#allocation2 + $0x8] sm:$0x3]
    %v47 = vld [vmem:[#allocation2 + $0xa] sm:$0x3]
    %v48 = vld [vmem:[#allocation2 + $0xc] sm:$0x3]
    %v49 = vld [vmem:[#allocation2 + $0xe] sm:$0x3]
    %v50 = vld [vmem:[#allocation5] sm:$0xff]
    %v52 = vrot.slane %v50, 1
    %v53 = vrot.slane %v50, 2
    %v54 = vrot.slane %v50, 3
    %v55 = vrot.slane %v50, 4
    %v56 = vrot.slane %v50, 5
    %v57 = vrot.slane %v50, 6
    %v58 = vrot.slane %v50, 7
    %v59 = vperm.slane %v50, 0
    %v60 = vperm.slane %v52, 0
    %v61 = vperm.slane %v53, 0
    %v62 = vperm.slane %v54, 0
    %v63 = vperm.slane %v55, 0
    %v64 = vperm.slane %v56, 0
    %v65 = vperm.slane %v57, 0
    %v66 = vperm.slane %v58, 0
    %v75 = vadd.f32 %v42, %v59
    %v76 = vadd.f32 %v43, %v60
    %v77 = vadd.f32 %v44, %v61
    %v78 = vadd.f32 %v45, %v62
    %v79 = vadd.f32 %v46, %v63
    %v80 = vadd.f32 %v47, %v64
    %v81 = vadd.f32 %v48, %v65
    %v82 = vadd.f32 %v49, %v66
    %vm83 = vcmask 254976
    %84 = vst.msk [vmem:[#allocation7] sm:$0x3] %vm83, %v75
    %85 = vst.msk [vmem:[#allocation7 + $0x2] sm:$0x3] %vm83, %v76
    %86 = vst.msk [vmem:[#allocation7 + $0x4] sm:$0x3] %vm83, %v77
    %87 = vst.msk [vmem:[#allocation7 + $0x6] sm:$0x3] %vm83, %v78
    %88 = vst.msk [vmem:[#allocation7 + $0x8] sm:$0x3] %vm83, %v79
    %89 = vst.msk [vmem:[#allocation7 + $0xa] sm:$0x3] %vm83, %v80
    %90 = vst.msk [vmem:[#allocation7 + $0xc] sm:$0x3] %vm83, %v81
    %91 = vst.msk [vmem:[#allocation7 + $0xe] sm:$0x3] %vm83, %v82
    // Predicated region
    $region18: #{tpu_custom_call.1} parent=1 // pred_check
      _
    $region19: #{tpu_custom_call.1} parent=1 // pred_check_branch
      %93 = sbr.rel (0) target = $region21
    $region20: #{tpu_custom_call.1} parent=1 // pred_region
      %95 = vsyncadd [#allocation4], 0
      %s96 = sshll.u32 [#allocation7], 4
      %s97 = int_to_ptr.vmem [resolvable:$true] %s96
      %s98 = sshll.u32 %s2, 4
      %s99 = int_to_ptr.hbm [resolvable:$true] %s98
      %104 = dma.vmem_to_hbm [thread:$0]  %s97, 256, %s99, [#allocation4], 32, 32, 2
    $region21: #{tpu_custom_call.1} parent=1 // pred_fallthru
      _
    // Predicated region
    $region22: #{tpu_custom_call.1} parent=1 // pred_check
      _
    $region23: #{tpu_custom_call.1} parent=1 // pred_check_branch
      %106 = sbr.rel (0) target = $region25
    $region24: #{tpu_custom_call.1} parent=1 // pred_region
      %108 = dma.done [#allocation4], 256
    $region25: #{tpu_custom_call.1} parent=1 // pred_fallthru
      _
    %109 = vsyncpa [#allocation3], 1
    %110 = vsyncpa [#allocation6], 1
    %111 = vsyncpa [#allocation4], 1

</llo_original>
